<compile_context>
chip_gen: v6e
topology: v6e:2x2x1
jax: 0.10.0
libtpu: 0.0.40
codegen_flags: <defaults>
</compile_context>

<pallas_src>
import functools

import jax
import jax.numpy as jnp
import numpy as np
from jax import lax
from jax.experimental import pallas as pl
from jax.experimental.pallas import tpu as pltpu


def _embedding_bag_kernel(off_ref, idx_ref, w_ref, out_ref, *,
                          num_bags, n_idx, vocab, tb):
    """One grid step processes `tb` batch rows.

    off_ref : (tb, W)     int32   bag start offsets
    idx_ref : (tb, N)     int32   flattened index stream
    w_ref   : (V, D)      f32     embedding table (constant block)
    out_ref : (tb, W, D)  f32     per-bag mean embeddings
    """
    idx = idx_ref[...]                        # (tb, N) int32
    off = off_ref[...]                        # (tb, W) int32

    # ---- vectorized bag windows: bag k of row r covers positions [off[r,k], end[r,k]) ----
    ends = jnp.concatenate(
        [off[:, 1:], jnp.full((tb, 1), n_idx, dtype=jnp.int32)], axis=1)       # (tb, W)
    pos = lax.broadcasted_iota(jnp.int32, (tb, num_bags, n_idx), 2)             # (tb, W, N)
    assign = jnp.logical_and(pos >= off[:, :, None], pos < ends[:, :, None])    # (tb, W, N)

    # ---- one-hot of the indices, vocab on the lane axis ----
    vocab_iota = lax.broadcasted_iota(jnp.int32, (tb, n_idx, vocab), 2)          # (tb, N, V)
    onehot = vocab_iota == idx[:, :, None]                                       # (tb, N, V)

    # ---- fused per-bag count matrix: counts[r,k,v] = #occurrences of v in bag k of row r ----
    # bf16 operands are exact (0/1) and the MXU accumulates in f32, so counts stay exact.
    counts = jnp.einsum(
        'rwn,rnv->rwv',
        assign.astype(jnp.bfloat16), onehot.astype(jnp.bfloat16),
        preferred_element_type=jnp.float32)                                      # (tb, W, V)

    # ---- single big matmul: (tb*W, V) @ (V, D) -> summed embeddings per bag ----
    counts2d = counts.reshape(tb * num_bags, vocab)
    sums = jnp.dot(counts2d, w_ref[...], preferred_element_type=jnp.float32)     # (tb*W, D)

    # ---- mean = sum / bag_size ; empty bags (size 0) -> zeros (torch mode='mean') ----
    # NOTE: out-of-range indices would contribute zero to the numerator but still count
    # in the denominator (position-based), whereas PyTorch raises; benign for valid inputs.
    bag_sizes = jnp.sum(assign.astype(jnp.float32), axis=2)                      # (tb, W)
    denom = jnp.maximum(bag_sizes, 1.0).reshape(tb * num_bags, 1)
    out = sums / denom                                                           # (tb*W, D)
    out_ref[...] = out.reshape(tb, num_bags, -1).astype(out_ref.dtype)


def _pick_batch_tile(B, W, N, V):
    """Largest tb dividing B s.t. intermediates stay small; aim for tb*W >= 256 MXU rows."""
    best = 1
    for tb in range(1, B + 1):
        if B % tb != 0:
            continue
        onehot_bytes = tb * N * V * 4
        if onehot_bytes > (8 << 20) and tb > 1:
            break
        best = tb
        if tb * W >= 256:
            break
    return best


def embedding_forward(indices, offsets, weight, *, batch_tile=None):
    """indices: [B, N] int32, offsets: [B, W] int32, weight: [V, D] f32 -> [B, W, D] f32."""
    B, N = indices.shape
    W = offsets.shape[1]
    V, D = weight.shape

    tb = batch_tile if batch_tile is not None else _pick_batch_tile(B, W, N, V)
    assert B % tb == 0, "batch_tile must divide batch size"

    kernel = functools.partial(
        _embedding_bag_kernel, num_bags=W, n_idx=N, vocab=V, tb=tb)

    # Rough per-step VMEM budget: double-buffered operands + kernel intermediates.
    step_bytes = (2 * V * D * 4            # weight (double-buffered constant block)
                  + 2 * tb * N * 4         # indices
                  + 2 * tb * W * 4         # offsets
                  + 2 * tb * W * D * 4     # output
                  + tb * N * V * 4         # one-hot intermediate
                  + 2 * tb * W * V * 4)    # counts intermediates
    # Raise v5e's 16 MiB scoped default, stay well under v7x's 64 MiB physical VMEM.
    vmem_limit = int(min(48 << 20, max(32 << 20, 2 * step_bytes)))

    grid_spec = pltpu.PrefetchScalarGridSpec(
        num_scalar_prefetch=0,
        grid=(B // tb,),
        in_specs=[
            pl.BlockSpec((tb, W), lambda i: (i, 0)),     # offsets (vector compares in-kernel)
            pl.BlockSpec((tb, N), lambda i: (i, 0)),     # indices
            pl.BlockSpec((V, D), lambda i: (0, 0)),      # full embedding table (constant block)
        ],
        out_specs=pl.BlockSpec((tb, W, D), lambda i: (i, 0, 0)),
    )

    return pl.pallas_call(
        kernel,
        out_shape=jax.ShapeDtypeStruct((B, W, D), jnp.float32),
        grid_spec=grid_spec,
        compiler_params=pltpu.CompilerParams(
            dimension_semantics=("parallel",),   # batch rows are independent (v7x: 2 TCs)
            vmem_limit_bytes=vmem_limit,
        ),
    )(offsets, indices, weight)


def embedding_forward_ref(indices, offsets, weight):
    """Pure numpy reference of nn.EmbeddingBag(mode='mean') applied per batch element."""
    indices = np.asarray(indices)
    offsets = np.asarray(offsets)
    weight = np.asarray(weight)
    B, N = indices.shape
    W = offsets.shape[1]
    D = weight.shape[1]
    out = np.zeros((B, W, D), dtype=np.float32)
    for b in range(B):
        for k in range(W):
            s = int(offsets[b, k])
            e = int(offsets[b, k + 1]) if (k + 1) < W else N
            if e > s:
                out[b, k] = weight[indices[b, s:e]].mean(axis=0)
    return out


if __name__ == "__main__":
    # small shapes consistent with the module
    batch_size = 2
    vocab_size = 64
    embed_dim = 128
    window = 4           # num_bags per batch element
    n_idx = 16           # sequence_length * window (flattened index stream)

    key = jax.random.PRNGKey(0)
    k_w, k_idx = jax.random.split(key)

    # init_weights(): uniform(-0.5, 0.5)
    weight = jax.random.uniform(
        k_w, (vocab_size, embed_dim), dtype=jnp.float32, minval=-0.5, maxval=0.5)

    indices = jax.random.randint(
        k_idx, (batch_size, n_idx), 0, vocab_size, dtype=jnp.int32)

    # deterministic, non-uniform bag boundaries per batch element
    offsets = jnp.array([[0, 3, 7, 12],
                         [0, 4, 8, 12]], dtype=jnp.int32)

    out = embedding_forward(indices, offsets, weight)
    out = jax.block_until_ready(out)

    ref = embedding_forward_ref(indices, offsets, weight)
    np.testing.assert_allclose(np.asarray(out), ref, rtol=1e-5, atol=1e-5)

    print("KERNEL_OK")
</pallas_src>

<mosaic_0001>
module attributes {stable_mosaic.version = 11 : i64} {
  func.func @_embedding_bag_kernel(%arg0: i32, %arg1: memref<2x4xi32, #tpu.memory_space<vmem>>, %arg2: memref<2x16xi32, #tpu.memory_space<vmem>>, %arg3: memref<64x128xf32, #tpu.memory_space<vmem>>, %arg4: memref<2x4x128xf32, #tpu.memory_space<vmem>>) attributes {dimension_semantics = [#tpu.dimension_semantics<parallel>], iteration_bounds = array<i64: 1>, scalar_prefetch = 0 : i64, scratch_operands = 0 : i64, tpu.core_type = #tpu.core_type<tc>, window_params = [{transform_indices = @transform_0, window_bounds = array<i64: 2, 4>}, {transform_indices = @transform_1, window_bounds = array<i64: 2, 16>}, {pipeline_mode = #tpu.pipeline_mode<synchronous>, transform_indices = @transform_2, window_bounds = array<i64: 64, 128>}, {transform_indices = @transform_3, window_bounds = array<i64: 2, 4, 128>}]} {
    %c0 = arith.constant 0 : index
    %c0_0 = arith.constant 0 : index
    %0 = vector.load %arg2[%c0, %c0_0] : memref<2x16xi32, #tpu.memory_space<vmem>>, vector<2x16xi32>
    %c0_1 = arith.constant 0 : index
    %c0_2 = arith.constant 0 : index
    %1 = vector.load %arg1[%c0_1, %c0_2] : memref<2x4xi32, #tpu.memory_space<vmem>>, vector<2x4xi32>
    %2 = vector.extract_strided_slice %1 {offsets = [0, 1], sizes = [2, 3], strides = [1, 1]} : vector<2x4xi32> to vector<2x3xi32>
    %c16_i32 = arith.constant 16 : i32
    %3 = vector.broadcast %c16_i32 : i32 to vector<2x1xi32>
    %4 = tpu.concatenate %2, %3 in 1 : vector<2x3xi32>, vector<2x1xi32> -> vector<2x4xi32>
    %5 = tpu.iota {dimensions = array<i32: 2>} : vector<2x4x16xi32>
    %6 = vector.shape_cast %1 : vector<2x4xi32> to vector<2x4x1xi32>
    %7 = vector.broadcast %6 : vector<2x4x1xi32> to vector<2x4x16xi32>
    %8 = arith.cmpi sge, %5, %7 : vector<2x4x16xi32>
    %9 = vector.shape_cast %4 : vector<2x4xi32> to vector<2x4x1xi32>
    %10 = vector.broadcast %9 : vector<2x4x1xi32> to vector<2x4x16xi32>
    %11 = arith.cmpi slt, %5, %10 : vector<2x4x16xi32>
    %12 = arith.andi %8, %11 : vector<2x4x16xi1>
    %13 = tpu.iota {dimensions = array<i32: 2>} : vector<2x16x64xi32>
    %14 = vector.shape_cast %0 : vector<2x16xi32> to vector<2x16x1xi32>
    %15 = vector.broadcast %14 : vector<2x16x1xi32> to vector<2x16x64xi32>
    %16 = arith.cmpi eq, %13, %15 : vector<2x16x64xi32>
    %17 = arith.extui %12 : vector<2x4x16xi1> to vector<2x4x16xi32>
    %18 = arith.sitofp %17 : vector<2x4x16xi32> to vector<2x4x16xf32>
    %19 = arith.truncf %18 : vector<2x4x16xf32> to vector<2x4x16xbf16>
    %20 = arith.extui %16 : vector<2x16x64xi1> to vector<2x16x64xi32>
    %21 = arith.sitofp %20 : vector<2x16x64xi32> to vector<2x16x64xf32>
    %22 = arith.truncf %21 : vector<2x16x64xf32> to vector<2x16x64xbf16>
    "tpu.trace_start"() <{level = 10 : i32, message = "rwn,rnv->rwv"}> : () -> ()
    %cst = arith.constant dense<0.000000e+00> : vector<2x4x64xf32>
    %23 = tpu.matmul %19, %22, %cst {dimension_numbers = #tpu.dot_dimension_numbers<[2], [1], [1], [2], [0, 0, 0, 1, 1, 2], [0], [0]>} : vector<2x4x16xbf16>, vector<2x16x64xbf16>, vector<2x4x64xf32> -> vector<2x4x64xf32>
    "tpu.trace_stop"() : () -> ()
    %24 = vector.shape_cast %23 : vector<2x4x64xf32> to vector<8x64xf32>
    %c0_3 = arith.constant 0 : index
    %c0_4 = arith.constant 0 : index
    %25 = vector.load %arg3[%c0_3, %c0_4] : memref<64x128xf32, #tpu.memory_space<vmem>>, vector<64x128xf32>
    %cst_5 = arith.constant dense<0.000000e+00> : vector<8x128xf32>
    %26 = tpu.matmul %24, %25, %cst_5 {dimension_numbers = #tpu.dot_dimension_numbers<[1], [0], [0], [1], [0, 0, 1, 1], [], []>} : vector<8x64xf32>, vector<64x128xf32>, vector<8x128xf32> -> vector<8x128xf32>
    %27 = arith.extui %12 : vector<2x4x16xi1> to vector<2x4x16xi32>
    %28 = arith.sitofp %27 : vector<2x4x16xi32> to vector<2x4x16xf32>
    %cst_6 = arith.constant dense<0.000000e+00> : vector<2x4xf32>
    %29 = vector.multi_reduction <add>, %28, %cst_6 [2] : vector<2x4x16xf32> to vector<2x4xf32>
    %cst_7 = arith.constant 1.000000e+00 : f32
    %30 = vector.broadcast %cst_7 : f32 to vector<2x4xf32>
    %31 = arith.maximumf %29, %30 : vector<2x4xf32>
    %32 = vector.shape_cast %31 : vector<2x4xf32> to vector<8x1xf32>
    %33 = vector.broadcast %32 : vector<8x1xf32> to vector<8x128xf32>
    %34 = arith.divf %26, %33 : vector<8x128xf32>
    %35 = vector.shape_cast %34 : vector<8x128xf32> to vector<2x4x128xf32>
    %c0_8 = arith.constant 0 : index
    %c0_9 = arith.constant 0 : index
    %c0_10 = arith.constant 0 : index
    %36 = vector.load %arg4[%c0_8, %c0_9, %c0_10] : memref<2x4x128xf32, #tpu.memory_space<vmem>>, vector<2x4x128xf32>
    tpu.vector_store %arg4[%c0_8, %c0_9, %c0_10], %35 {strides = array<i32>} : memref<2x4x128xf32, #tpu.memory_space<vmem>>, vector<2x4x128xf32>,
    return
  }
  func.func @transform_0(%arg0: i32) -> (i32, i32) {
    %c0_i32 = arith.constant 0 : i32
    %c0_i32_0 = arith.constant 0 : i32
    return %arg0, %c0_i32 : i32, i32
  }
  func.func @transform_1(%arg0: i32) -> (i32, i32) {
    %c0_i32 = arith.constant 0 : i32
    %c0_i32_0 = arith.constant 0 : i32
    return %arg0, %c0_i32 : i32, i32
  }
  func.func @transform_2(%arg0: i32) -> (i32, i32) {
    %c0_i32 = arith.constant 0 : i32
    %c0_i32_0 = arith.constant 0 : i32
    %c0_i32_1 = arith.constant 0 : i32
    return %c0_i32, %c0_i32_0 : i32, i32
  }
  func.func @transform_3(%arg0: i32) -> (i32, i32, i32) {
    %c0_i32 = arith.constant 0 : i32
    %c0_i32_0 = arith.constant 0 : i32
    %c0_i32_1 = arith.constant 0 : i32
    return %arg0, %c0_i32, %c0_i32_0 : i32, i32, i32
  }
}

</mosaic_0001>

<llo_original>
// kernel: tpu_custom_call.1
$region0: #{tpu_custom_call.1}
  #allocation0 [shape = 'u32[]', space=smem, size = 0x4, offset = 0x4, fixed_abs, tag = 'smem constant byte address 0x4 - core index']
  #allocation1 [shape = 'u32[144,128]{1,0:T(1,128)}', space=vmem, size = 0x12000, scoped, tag = 'internal scratch']
  %s0 = inlined_call_operand.hbm [shape: s32[2,4], index: 0, kind: input, shape index: {}]
  %s1 = inlined_call_operand.hbm [shape: s32[2,16], index: 1, kind: input, shape index: {}]
  %s2 = inlined_call_operand.hbm [shape: f32[64,128], index: 2, kind: input, shape index: {}]
  %s3 = inlined_call_operand.hbm [shape: f32[2,4,128], index: 3, kind: output, shape index: {}]
  %s4 = sld [smem:[#allocation0]]
  $region34: #{tpu_custom_call.1} parent=0
    _
  %s6 = ssub.s32 1, %s4
  %s7 = scalar_select 0, %s6, %s4
  $region1: #{tpu_custom_call.1} parent=0
    #allocation2 [shape = 'u8[1024]{0}', space=vmem, size = 0x400, scoped, tag = 'input window, operand 0, single buffered']
    #allocation3 [shape = 's32[1]{0}', space=sflag, size = 0x4, scoped, tag = 'scoped memory for tpu_custom_call.1']
    #allocation4 [shape = 's32[1]{0}', space=sflag, size = 0x4, scoped, tag = 'scoped memory for tpu_custom_call.1']
    #allocation5 [shape = 'u8[1024]{0}', space=vmem, size = 0x400, scoped, tag = 'input window, operand 1, single buffered']
    #allocation6 [shape = 's32[1]{0}', space=sflag, size = 0x4, scoped, tag = 'scoped memory for tpu_custom_call.1']
    #allocation7 [shape = 'u8[32768]{0}', space=vmem, size = 0x8000, scoped, tag = 'input window, operand 2, single buffered']
    #allocation8 [shape = 'u8[4096]{0}', space=vmem, size = 0x1000, scoped, tag = 'output window, operand 0, single buffered']
    %8 = vsyncpa [#allocation3], 0
    %9 = vsyncpa [#allocation6], 0
    %10 = vsyncpa [#allocation4], 0
    // Predicated region
    $region2: #{tpu_custom_call.1} parent=1 // pred_check
      _
    $region3: #{tpu_custom_call.1} parent=1 // pred_check_branch
      %12 = sbr.rel (0) target = $region5
    $region4: #{tpu_custom_call.1} parent=1 // pred_region
      %s14 = ssub.s32 32, 32
      %15 = vsyncadd [#allocation3], %s14
      %s17 = sshll.u32 [#allocation2], 4
      %s18 = int_to_ptr.vmem [resolvable:$true] %s17
      %20 = dma.hbm_to_vmem [thread:$0]  %s0, 32, %s18, [#allocation3]
    $region5: #{tpu_custom_call.1} parent=1 // pred_fallthru
      _
    // Predicated region
    $region6: #{tpu_custom_call.1} parent=1 // pred_check
      _
    $region7: #{tpu_custom_call.1} parent=1 // pred_check_branch
      %22 = sbr.rel (0) target = $region9
    $region8: #{tpu_custom_call.1} parent=1 // pred_region
      %s24 = ssub.s32 32, 32
      %25 = vsyncadd [#allocation6], %s24
      %s27 = sshll.u32 [#allocation5], 4
      %s28 = int_to_ptr.vmem [resolvable:$true] %s27
      %30 = dma.hbm_to_vmem [thread:$0]  %s1, 32, %s28, [#allocation6]
    $region9: #{tpu_custom_call.1} parent=1 // pred_fallthru
      _
    // Predicated region
    $region10: #{tpu_custom_call.1} parent=1 // pred_check
      _
    $region11: #{tpu_custom_call.1} parent=1 // pred_check_branch
      %32 = sbr.rel (0) target = $region13
    $region12: #{tpu_custom_call.1} parent=1 // pred_region
      %s34 = ssub.s32 1024, 1024
      %35 = vsyncadd [#allocation6], %s34
      %s36 = sshll.u32 [#allocation7], 4
      %s37 = int_to_ptr.vmem [resolvable:$true] %s36
      %42 = dma.hbm_to_vmem [thread:$0]  %s2, 1024, %s37, [#allocation6], 128, 128, 8
    $region13: #{tpu_custom_call.1} parent=1 // pred_fallthru
      _
    // Predicated region
    $region14: #{tpu_custom_call.1} parent=1 // pred_check
      _
    $region15: #{tpu_custom_call.1} parent=1 // pred_check_branch
      %44 = sbr.rel (0) target = $region17
    $region16: #{tpu_custom_call.1} parent=1 // pred_region
      %45 = dma.done [#allocation3], 32
    $region17: #{tpu_custom_call.1} parent=1 // pred_fallthru
      _
    // Predicated region
    $region18: #{tpu_custom_call.1} parent=1 // pred_check
      _
    $region19: #{tpu_custom_call.1} parent=1 // pred_check_branch
      %47 = sbr.rel (0) target = $region21
    $region20: #{tpu_custom_call.1} parent=1 // pred_region
      %48 = dma.done [#allocation6], 32
    $region21: #{tpu_custom_call.1} parent=1 // pred_fallthru
      _
    // Predicated region
    $region22: #{tpu_custom_call.1} parent=1 // pred_check
      _
    $region23: #{tpu_custom_call.1} parent=1 // pred_check_branch
      %50 = sbr.rel (0) target = $region25
    $region24: #{tpu_custom_call.1} parent=1 // pred_region
      %51 = dma.done [#allocation6], 1024
    $region25: #{tpu_custom_call.1} parent=1 // pred_fallthru
      _
    %v53 = vld [vmem:[#allocation5] sm:$0x3]
    %v54 = vld [vmem:[#allocation2] sm:$0x3]
    %55 = vrot.lane.b32.xlu0 %v54, 127
    %v56 = vpop.permute.xlu0 %55
    %vm57 = vcmask 23552
    %v58 = vsel %vm57, %v56, 16
    %v59 = vlaneseq
    %v60 = vand.u32 %v59, 127
    %v61 = vlaneseq
    %v62 = vshrl.u32 %v61, 7
    %v63 = vsub.s32 0, %v62
    %v64 = vrot.slane %v54, %v63
    %66 = vbcast.lane.b32.xlu0 %v64, 256
    %v67 = vpop.permute.xlu0 %66
    %v68 = vlaneseq
    %v69 = vshrl.u32 %v68, 7
    %v70 = vsub.s32 1, %v69
    %v71 = vrot.slane %v54, %v70
    %73 = vbcast.lane.b32.xlu0 %v71, 256
    %v74 = vpop.permute.xlu0 %73
    %vm75 = vcmp.ge.s32.totalorder %v60, %v67
    %vm76 = vcmp.ge.s32.totalorder %v60, %v74
    %v77 = vlaneseq
    %v78 = vshrl.u32 %v77, 7
    %v79 = vsub.s32 0, %v78
    %v80 = vrot.slane %v58, %v79
    %82 = vbcast.lane.b32.xlu0 %v80, 256
    %v83 = vpop.permute.xlu0 %82
    %v84 = vlaneseq
    %v85 = vshrl.u32 %v84, 7
    %v86 = vsub.s32 1, %v85
    %v87 = vrot.slane %v58, %v86
    %89 = vbcast.lane.b32.xlu0 %v87, 256
    %v90 = vpop.permute.xlu0 %89
    %vm91 = vcmp.lt.s32.totalorder %v60, %v83
    %vm92 = vcmp.lt.s32.totalorder %v60, %v90
    %vm93 = vmand %vm75, %vm91
    %vm94 = vmand %vm76, %vm92
    %v95 = vlaneseq
    %v96 = vshrl.u32 %v95, 7
    %v97 = vsub.s32 0, %v96
    %v98 = vrot.slane %v53, %v97
    %100 = vbcast.lane.b32.xlu0 %v98, 256
    %v101 = vpop.permute.xlu0 %100
    %s103 = sor.u32 256, 8
    %104 = vbcast.lane.b32.xlu0 %v98, %s103
    %v105 = vpop.permute.xlu0 %104
    %v106 = vlaneseq
    %v107 = vshrl.u32 %v106, 7
    %v108 = vsub.s32 1, %v107
    %v109 = vrot.slane %v53, %v108
    %111 = vbcast.lane.b32.xlu0 %v109, 256
    %v112 = vpop.permute.xlu0 %111
    %s114 = sor.u32 256, 8
    %115 = vbcast.lane.b32.xlu0 %v109, %s114
    %v116 = vpop.permute.xlu0 %115
    %vm117 = vcmp.eq.s32.totalorder %v60, %v101
    %vm118 = vcmp.eq.s32.totalorder %v60, %v105
    %vm119 = vcmp.eq.s32.totalorder %v60, %v112
    %vm120 = vcmp.eq.s32.totalorder %v60, %v116
    %v121 = vsel %vm93, 1, 0
    %v122 = vsel %vm94, 1, 0
    %v123 = vcvt.s32.f32 %v121
    %v124 = vcvt.s32.f32 %v122
    %v125 = vpack.c.bf16 %v123, %v123
    %v126 = vpack.c.bf16 %v124, %v124
    %v127 = vsel %vm117, 1, 0
    %v128 = vsel %vm118, 1, 0
    %v129 = vsel %vm119, 1, 0
    %v130 = vsel %vm120, 1, 0
    %v131 = vcvt.s32.f32 %v127
    %v132 = vcvt.s32.f32 %v128
    %v133 = vcvt.s32.f32 %v129
    %v134 = vcvt.s32.f32 %v130
    %v135 = vpack.c.bf16 %v132, %v131
    %v136 = vpack.c.bf16 %v134, %v133
    %vm137 = vcmask 130048
    %v139 = vsel %vm137, %v125, 0
    %141 = vmatprep.subr.bf16.mxu0 0
    %142 = vmatpush1.bf16.msra.mxu0 0
    %143 = vmatprep.subr.bf16.mxu0 0
    %144 = vmatpush1.bf16.msra.mxu0 0
    %145 = vmatprep.subr.bf16.mxu0 0
    %146 = vmatpush1.bf16.msra.mxu0 0
    %147 = vmatprep.subr.bf16.mxu0 0
    %148 = vmatpush1.bf16.msra.mxu0 0
    %149 = vmatprep.subr.bf16.mxu0 0
    %150 = vmatpush1.bf16.msra.mxu0 0
    %151 = vmatprep.subr.bf16.mxu0 0
    %152 = vmatpush1.bf16.msra.mxu0 0
    %153 = vmatprep.subr.bf16.mxu0 0
    %154 = vmatpush1.bf16.msra.mxu0 0
    %155 = vmatprep.subr.bf16.mxu0 0
    %156 = vmatpush1.bf16.msra.mxu0 %v135
    %157 = vmatprep.subr.bf16.mxu0 0
    %158 = vmatpush2.bf16.msra.mxu0 0
    %159 = vmatprep.subr.bf16.mxu0 0
    %160 = vmatpush2.bf16.msra.mxu0 0
    %161 = vmatprep.subr.bf16.mxu0 0
    %162 = vmatpush2.bf16.msra.mxu0 0
    %163 = vmatprep.subr.bf16.mxu0 0
    %164 = vmatpush2.bf16.msra.mxu0 0
    %165 = vmatprep.subr.bf16.mxu0 0
    %166 = vmatpush2.bf16.msra.mxu0 0
    %167 = vmatprep.subr.bf16.mxu0 0
    %168 = vmatpush2.bf16.msra.mxu0 0
    %169 = vmatprep.subr.bf16.mxu0 0
    %170 = vmatpush2.bf16.msra.mxu0 0
    %171 = vmatprep.subr.bf16.mxu0 0
    %172 = vmatpush2.bf16.msra.mxu0 0
    %173 = vmatprep.mubr.bf16.mxu0 0
    %174 = vmatmul.mubr.bf16.gmra.mxu0 %v139
    %v175 = vpop.f32.mrf.mxu0
    %v176 = vadd.f32 0.0, %v175
    %v177 = vpop.f32.mrf.mxu0
    %v178 = vpop.f32.mrf.mxu0
    %v179 = vpop.f32.mrf.mxu0
    %180 = vdwg.mxu0
    %v182 = vsel %vm137, %v126, 0
    %184 = vmatprep.subr.bf16.mxu0 0
    %185 = vmatpush1.bf16.msra.mxu0 0
    %186 = vmatprep.subr.bf16.mxu0 0
    %187 = vmatpush1.bf16.msra.mxu0 0
    %188 = vmatprep.subr.bf16.mxu0 0
    %189 = vmatpush1.bf16.msra.mxu0 0
    %190 = vmatprep.subr.bf16.mxu0 0
    %191 = vmatpush1.bf16.msra.mxu0 0
    %192 = vmatprep.subr.bf16.mxu0 0
    %193 = vmatpush1.bf16.msra.mxu0 0
    %194 = vmatprep.subr.bf16.mxu0 0
    %195 = vmatpush1.bf16.msra.mxu0 0
    %196 = vmatprep.subr.bf16.mxu0 0
    %197 = vmatpush1.bf16.msra.mxu0 0
    %198 = vmatprep.subr.bf16.mxu0 0
    %199 = vmatpush1.bf16.msra.mxu0 %v136
    %200 = vmatprep.subr.bf16.mxu0 0
    %201 = vmatpush2.bf16.msra.mxu0 0
    %202 = vmatprep.subr.bf16.mxu0 0
    %203 = vmatpush2.bf16.msra.mxu0 0
    %204 = vmatprep.subr.bf16.mxu0 0
    %205 = vmatpush2.bf16.msra.mxu0 0
    %206 = vmatprep.subr.bf16.mxu0 0
    %207 = vmatpush2.bf16.msra.mxu0 0
    %208 = vmatprep.subr.bf16.mxu0 0
    %209 = vmatpush2.bf16.msra.mxu0 0
    %210 = vmatprep.subr.bf16.mxu0 0
    %211 = vmatpush2.bf16.msra.mxu0 0
    %212 = vmatprep.subr.bf16.mxu0 0
    %213 = vmatpush2.bf16.msra.mxu0 0
    %214 = vmatprep.subr.bf16.mxu0 0
    %215 = vmatpush2.bf16.msra.mxu0 0
    %216 = vmatprep.mubr.bf16.mxu0 0
    %217 = vmatmul.mubr.bf16.gmra.mxu0 %v182
    %v218 = vpop.f32.mrf.mxu0
    %v219 = vadd.f32 0.0, %v218
    %v220 = vpop.f32.mrf.mxu0
    %v221 = vpop.f32.mrf.mxu0
    %v222 = vpop.f32.mrf.mxu0
    %223 = vdwg.mxu0
    %v224 = vld [vmem:[#allocation7] sm:$0xff]
    %v225 = vld [vmem:[#allocation7 + $0x8] sm:$0xff]
    %v226 = vld [vmem:[#allocation7 + $0x10] sm:$0xff]
    %v227 = vld [vmem:[#allocation7 + $0x18] sm:$0xff]
    %v228 = vld [vmem:[#allocation7 + $0x20] sm:$0xff]
    %v229 = vld [vmem:[#allocation7 + $0x28] sm:$0xff]
    %v230 = vld [vmem:[#allocation7 + $0x30] sm:$0xff]
    %v231 = vld [vmem:[#allocation7 + $0x38] sm:$0xff]
    %v234 = vcombine.low %v176, %v219
    %vm235 = vcmask 523264
    %v236 = vsel %vm235, %v234, 0
    %238 = vmatprep.subr.mxu0 0.0
    %239 = vmatpush1.msra.mxu0 0.0
    %240 = vmatprep.subr.mxu0 0.0
    %241 = vmatpush1.msra.mxu0 0.0
    %242 = vmatprep.subr.mxu0 0.0
    %243 = vmatpush1.msra.mxu0 0.0
    %244 = vmatprep.subr.mxu0 0.0
    %245 = vmatpush1.msra.mxu0 0.0
    %246 = vmatprep.subr.mxu0 0.0
    %247 = vmatpush1.msra.mxu0 0.0
    %248 = vmatprep.subr.mxu0 0.0
    %249 = vmatpush1.msra.mxu0 0.0
    %250 = vmatprep.subr.mxu0 0.0
    %251 = vmatpush1.msra.mxu0 0.0
    %252 = vmatprep.subr.mxu0 0.0
    %253 = vmatpush1.msra.mxu0 0.0
    %254 = vmatprep.subr.mxu0 0.0
    %255 = vmatpush1.msra.mxu0 %v231
    %256 = vmatprep.subr.mxu0 0.0
    %257 = vmatpush1.msra.mxu0 %v230
    %258 = vmatprep.subr.mxu0 0.0
    %259 = vmatpush1.msra.mxu0 %v229
    %260 = vmatprep.subr.mxu0 0.0
    %261 = vmatpush1.msra.mxu0 %v228
    %262 = vmatprep.subr.mxu0 0.0
    %263 = vmatpush1.msra.mxu0 %v227
    %264 = vmatprep.subr.mxu0 0.0
    %265 = vmatpush1.msra.mxu0 %v226
    %266 = vmatprep.subr.mxu0 0.0
    %267 = vmatpush1.msra.mxu0 %v225
    %268 = vmatprep.subr.mxu0 0.0
    %269 = vmatpush1.msra.mxu0 %v224
    %270 = vmatprep.subr.mxu0 0.0
    %271 = vmatpush2.msra.mxu0 0.0
    %272 = vmatprep.subr.mxu0 0.0
    %273 = vmatpush2.msra.mxu0 0.0
    %274 = vmatprep.subr.mxu0 0.0
    %275 = vmatpush2.msra.mxu0 0.0
    %276 = vmatprep.subr.mxu0 0.0
    %277 = vmatpush2.msra.mxu0 0.0
    %278 = vmatprep.subr.mxu0 0.0
    %279 = vmatpush2.msra.mxu0 0.0
    %280 = vmatprep.subr.mxu0 0.0
    %281 = vmatpush2.msra.mxu0 0.0
    %282 = vmatprep.subr.mxu0 0.0
    %283 = vmatpush2.msra.mxu0 0.0
    %284 = vmatprep.subr.mxu0 0.0
    %285 = vmatpush2.msra.mxu0 0.0
    %286 = vmatprep.subr.mxu0 0.0
    %287 = vmatpush2.msra.mxu0 0.0
    %288 = vmatprep.subr.mxu0 0.0
    %289 = vmatpush2.msra.mxu0 0.0
    %290 = vmatprep.subr.mxu0 0.0
    %291 = vmatpush2.msra.mxu0 0.0
    %292 = vmatprep.subr.mxu0 0.0
    %293 = vmatpush2.msra.mxu0 0.0
    %294 = vmatprep.subr.mxu0 0.0
    %295 = vmatpush2.msra.mxu0 0.0
    %296 = vmatprep.subr.mxu0 0.0
    %297 = vmatpush2.msra.mxu0 0.0
    %298 = vmatprep.subr.mxu0 0.0
    %299 = vmatpush2.msra.mxu0 0.0
    %300 = vmatprep.subr.mxu0 0.0
    %301 = vmatpush2.msra.mxu0 0.0
    %302 = vmatprep.mubr.f32.mxu0 0.0
    %303 = vmatmul.mubr.f32.gmra.mxu0 %v236
    %v304 = vpop.f32.mrf.mxu0
    %v305 = vadd.f32 0.0, %v304
    %v306 = vpop.f32.mrf.mxu0
    %307 = vdwg.mxu0
    %vm308 = vcmask 125952
    %v309 = vsel %vm308, %v123, 0.0
    %310 = vadd.xlane.f32.xlu0 %v309
    %v311 = vpop.xlane.xlu0 %310
    %v312 = vsel %vm308, %v124, 0.0
    %313 = vadd.xlane.f32.xlu0 %v312
    %v314 = vpop.xlane.xlu0 %313
    %v315 = vmax.f32 %v311, 1.0
    %v316 = vmax.f32 %v314, 1.0
    %v319 = vcombine.low %v315, %v316
    %v321 = vrcp.pop %v319
    %v322 = vmul.f32 %v305, %v321
    %v324 = vcombine.high %v322, %v322
    %326 = vst [vmem:[#allocation8] sm:$0xf] %v322
    %327 = vst [vmem:[#allocation8 + $0x4] sm:$0xf] %v324
    // Predicated region
    $region26: #{tpu_custom_call.1} parent=1 // pred_check
      _
    $region27: #{tpu_custom_call.1} parent=1 // pred_check_branch
      %329 = sbr.rel (0) target = $region29
    $region28: #{tpu_custom_call.1} parent=1 // pred_region
      %s331 = ssub.s32 128, 128
      %332 = vsyncadd [#allocation4], %s331
      %s333 = sshll.u32 [#allocation8], 4
      %s334 = int_to_ptr.vmem [resolvable:$true] %s333
      %339 = dma.vmem_to_hbm [thread:$0]  %s334, 128, %s3, [#allocation4], 64, 64, 4
    $region29: #{tpu_custom_call.1} parent=1 // pred_fallthru
      _
    // Predicated region
    $region30: #{tpu_custom_call.1} parent=1 // pred_check
      _
    $region31: #{tpu_custom_call.1} parent=1 // pred_check_branch
      %341 = sbr.rel (0) target = $region33
    $region32: #{tpu_custom_call.1} parent=1 // pred_region
      %342 = dma.done [#allocation4], 128
    $region33: #{tpu_custom_call.1} parent=1 // pred_fallthru
      _
    %343 = vsyncpa [#allocation3], 1
    %344 = vsyncpa [#allocation6], 1
    %345 = vsyncpa [#allocation4], 1

</llo_original>
